<compile_context>
chip_gen: v7x
topology: tpu7x:2x2x1
jax: 0.10.0
libtpu: 0.0.40
codegen_flags: <defaults>
</compile_context>

<pallas_src>
import jax
import jax.numpy as jnp
from jax.experimental import pallas as pl
from jax.experimental.pallas import tpu as pltpu


_LANE = 128
_LANE_CAP = 1024


def _swish_kernel(x_ref, o_ref):
    x = x_ref[...].astype(jnp.float32)
    # sigmoid = 1 / (1 + exp(-x)); exp / divide land on the EUP slot (free next to
    # the HBM-bound DMA traffic).  Full-precision path keeps bit-level accuracy.
    o_ref[...] = (x * jax.nn.sigmoid(x)).astype(o_ref.dtype)


def _cdiv(a, b):
    return (a + b - 1) // b


def _round_up(x, m):
    return ((x + m - 1) // m) * m


def _sublane(dtype):
    # Sublane packing: 8 rows for 4-byte dtypes, 16 for 2-byte, 32 for 1-byte.
    return {4: 8, 2: 16, 1: 32}.get(jnp.dtype(dtype).itemsize, 8)


def _target_tile_bytes():
    # v5e's default scoped VMEM is ~16 MiB -> 2 MiB tiles (x in/out x double-buffer
    # = 8 MiB).  v6e / v7x default to ~32 MiB scoped VMEM -> 4 MiB tiles amortize
    # the ~0.35 us per-grid-step overhead better at their higher HBM bandwidth.
    try:
        kind = jax.devices()[0].device_kind.lower()
    except Exception:
        return 2 * 1024 * 1024
    if "v5 lite" in kind or "v5lite" in kind or "v5e" in kind:
        return 2 * 1024 * 1024
    return 4 * 1024 * 1024


def _choose_layout(n, dtype):
    """Pick (rows, lanes, block_rows, grid) for n elements; requires n % 128 == 0."""
    sub = _sublane(dtype)
    itemsize = jnp.dtype(dtype).itemsize

    # Lane width: largest power-of-two multiple of 128 (<= 1024) that divides n
    # exactly (no padding) while keeping at least one sublane group of rows.
    lanes = _LANE
    while (lanes * 2 <= _LANE_CAP and n % (lanes * 2) == 0
           and n // (lanes * 2) >= sub):
        lanes *= 2
    rows = n // lanes

    total_bytes = n * itemsize
    tile_bytes = _target_tile_bytes()

    # Tiny inputs: single full-extent block (no (sub,128) divisibility required).
    if rows <= sub or total_bytes <= 64 * 1024:
        return rows, lanes, rows, 1

    # Largest row block (multiple of the dtype's sublane packing) within the
    # per-generation tile budget.
    row_bytes = lanes * itemsize
    max_block_rows = max(sub, (tile_bytes // row_bytes) // sub * sub)
    steps = _cdiv(rows, max_block_rows)

    # Enough grid steps for megacore sharding + DMA overlap once the data is big
    # enough that per-step overhead stays negligible.
    min_steps = 1
    if total_bytes >= 1 * 1024 * 1024:
        min_steps = 2      # both v7x TensorCores get work
    if total_bytes >= 4 * 1024 * 1024:
        min_steps = 4      # prefetch of i+1 overlaps writeback of i-1
    if total_bytes >= 16 * 1024 * 1024:
        min_steps = 8
    min_steps = min(min_steps, max(1, rows // sub))
    steps = max(steps, min_steps)
    if steps > 1 and steps % 2:
        steps += 1         # even step count: no half-idle final megacore step

    block_rows = min(rows, _round_up(_cdiv(rows, steps), sub))
    grid = _cdiv(rows, block_rows)   # ragged last block (if any) is clipped by Pallas
    return rows, lanes, block_rows, grid


def swish(x):
    """Elementwise x * sigmoid(x); same shape and dtype as the input."""
    n = x.size
    if n == 0:
        return x

    flat = x.reshape(-1)
    pad = 0
    if n % _LANE != 0:
        # Rare fallback: element count not a multiple of 128.  swish(0) == 0 and the
        # pad tail is sliced off, so results are exact.
        # TODO(synk): replace with an in-kernel masked store on the last block to
        # avoid the extra HBM pass the pad/slice costs.
        pad = _round_up(n, _LANE) - n
        flat = jnp.pad(flat, (0, pad))

    total = n + pad
    rows, lanes, block_rows, grid = _choose_layout(total, x.dtype)
    a2d = flat.reshape(rows, lanes)

    out = pl.pallas_call(
        _swish_kernel,
        out_shape=jax.ShapeDtypeStruct((rows, lanes), x.dtype),
        grid_spec=pltpu.PrefetchScalarGridSpec(
            num_scalar_prefetch=0,
            grid=(grid,),
            in_specs=[pl.BlockSpec((block_rows, lanes), lambda i: (i, 0))],
            out_specs=pl.BlockSpec((block_rows, lanes), lambda i: (i, 0)),
        ),
        # Tiles are <= 4 MiB (<= 2 MiB on v5e); 32 MiB scoped VMEM is a safety net
        # that is valid on every generation (v7x physical VMEM is 64 MiB).
        compiler_params=pltpu.CompilerParams(
            dimension_semantics=("parallel",),
            vmem_limit_bytes=32 * 1024 * 1024,
        ),
    )(a2d)

    if pad:
        return out.reshape(-1)[:n].reshape(x.shape)
    return out.reshape(x.shape)


if __name__ == "__main__":
    key = jax.random.PRNGKey(0)

    # Small NCHW-style input, matching how the PyTorch Swish activation is used.
    x = jax.random.normal(key, (2, 4, 16, 16), jnp.float32)
    y = jax.block_until_ready(swish(x))
    assert y.shape == x.shape and y.dtype == x.dtype, (y.shape, y.dtype)
    ref = x * jax.nn.sigmoid(x)
    assert bool(jnp.all(jnp.isfinite(y)))
    assert bool(jnp.allclose(y, ref, atol=1e-5, rtol=1e-5)), float(jnp.max(jnp.abs(y - ref)))

    # bf16 path (16-row sublane packing).
    xb = jax.random.normal(key, (2, 4, 16, 16), jnp.bfloat16)
    yb = jax.block_until_ready(swish(xb))
    assert yb.shape == xb.shape and yb.dtype == xb.dtype
    refb = xb.astype(jnp.float32) * jax.nn.sigmoid(xb.astype(jnp.float32))
    assert bool(jnp.allclose(yb.astype(jnp.float32), refb, atol=2e-2, rtol=2e-2))

    # Ragged, non-128-divisible element count exercises the pad fallback.
    xr = jax.random.normal(key, (3, 5, 7), jnp.float32)
    yr = jax.block_until_ready(swish(xr))
    assert yr.shape == xr.shape
    assert bool(jnp.allclose(yr, xr * jax.nn.sigmoid(xr), atol=1e-5, rtol=1e-5))

    print("KERNEL_OK")
</pallas_src>

<mosaic_0001>
module attributes {stable_mosaic.version = 11 : i64} {
  func.func @_swish_kernel(%arg0: i32, %arg1: memref<8x256xf32, #tpu.memory_space<vmem>>, %arg2: memref<8x256xf32, #tpu.memory_space<vmem>>) attributes {dimension_semantics = [#tpu.dimension_semantics<parallel>], iteration_bounds = array<i64: 1>, scalar_prefetch = 0 : i64, scratch_operands = 0 : i64, tpu.core_type = #tpu.core_type<tc>, window_params = [{transform_indices = @transform_0, window_bounds = array<i64: 8, 256>}, {transform_indices = @transform_1, window_bounds = array<i64: 8, 256>}]} {
    %c0 = arith.constant 0 : index
    %c0_0 = arith.constant 0 : index
    %0 = vector.load %arg1[%c0, %c0_0] : memref<8x256xf32, #tpu.memory_space<vmem>>, vector<8x256xf32>
    %1 = arith.negf %0 : vector<8x256xf32>
    %2 = math.exp %1 : vector<8x256xf32>
    %cst = arith.constant 1.000000e+00 : f32
    %3 = vector.broadcast %cst : f32 to vector<8x256xf32>
    %4 = arith.addf %3, %2 : vector<8x256xf32>
    %5 = arith.divf %3, %4 : vector<8x256xf32>
    %6 = arith.mulf %0, %5 : vector<8x256xf32>
    %c0_1 = arith.constant 0 : index
    %c0_2 = arith.constant 0 : index
    %7 = vector.load %arg2[%c0_1, %c0_2] : memref<8x256xf32, #tpu.memory_space<vmem>>, vector<8x256xf32>
    tpu.vector_store %arg2[%c0_1, %c0_2], %6 {strides = array<i32>} : memref<8x256xf32, #tpu.memory_space<vmem>>, vector<8x256xf32>,
    return
  }
  func.func @transform_0(%arg0: i32) -> (i32, i32) {
    %c0_i32 = arith.constant 0 : i32
    %c0_i32_0 = arith.constant 0 : i32
    return %arg0, %c0_i32 : i32, i32
  }
  func.func @transform_1(%arg0: i32) -> (i32, i32) {
    %c0_i32 = arith.constant 0 : i32
    %c0_i32_0 = arith.constant 0 : i32
    return %arg0, %c0_i32 : i32, i32
  }
}

</mosaic_0001>

<llo_original>
// kernel: tpu_custom_call.1
$region0: #{tpu_custom_call.1}
  #allocation0 [shape = 'u32[]', space=smem, size = 0x4, offset = 0x4, fixed_abs, tag = 'smem constant byte address 0x4 - core index']
  #allocation1 [shape = 'u32[144,128]{1,0:T(1,128)}', space=vmem, size = 0x12000, scoped, tag = 'internal scratch']
  %s0 = inlined_call_operand.hbm [shape: f32[8,256], index: 0, kind: input, shape index: {}]
  %s1 = inlined_call_operand.hbm [shape: f32[8,256], index: 1, kind: output, shape index: {}]
  %s2 = sld [smem:[#allocation0]]
  $region18: #{tpu_custom_call.1} parent=0
    _
  %s4 = ssub.s32 1, %s2
  %s5 = scalar_select 0, %s4, %s2
  $region1: #{tpu_custom_call.1} parent=0
    #allocation2 [shape = 'u8[8192]{0}', space=vmem, size = 0x2000, scoped, tag = 'input window, operand 0, single buffered']
    #allocation3 [shape = 's32[1]{0}', space=sflag, size = 0x4, scoped, tag = 'scoped memory for tpu_custom_call.1']
    #allocation4 [shape = 's32[1]{0}', space=sflag, size = 0x4, scoped, tag = 'scoped memory for tpu_custom_call.1']
    #allocation5 [shape = 'u8[8192]{0}', space=vmem, size = 0x2000, scoped, tag = 'output window, operand 0, single buffered']
    %6 = vsyncpa [#allocation3], 0
    %7 = vsyncpa [#allocation4], 0
    // Predicated region
    $region2: #{tpu_custom_call.1} parent=1 // pred_check
      _
    $region3: #{tpu_custom_call.1} parent=1 // pred_check_branch
      %9 = sbr.rel (0) target = $region5
    $region4: #{tpu_custom_call.1} parent=1 // pred_region
      %s11 = ssub.s32 256, 256
      %12 = vsyncadd [#allocation3], %s11
      %s14 = sshll.u32 [#allocation2], 4
      %s15 = int_to_ptr.vmem [resolvable:$true] %s14
      %17 = dma.hbm_to_vmem [thread:$0]  %s0, 256, %s15, [#allocation3]
    $region5: #{tpu_custom_call.1} parent=1 // pred_fallthru
      _
    // Predicated region
    $region6: #{tpu_custom_call.1} parent=1 // pred_check
      _
    $region7: #{tpu_custom_call.1} parent=1 // pred_check_branch
      %19 = sbr.rel (0) target = $region9
    $region8: #{tpu_custom_call.1} parent=1 // pred_region
      %20 = dma.done [#allocation3], 256
    $region9: #{tpu_custom_call.1} parent=1 // pred_fallthru
      _
    %v21 = vld [vmem:[#allocation2] sm:$0xff]
    %v22 = vld [vmem:[#allocation2 + $0x8] sm:$0xff]
    %v23 = vxor.u32 %v21, 2147483648
    %v24 = vxor.u32 %v22, 2147483648
    %v25 = vmul.f32 %v23, 1.442695
    %v26 = vpow.pop %v25
    %v27 = vmul.f32 %v24, 1.442695
    %v28 = vpow.pop %v27
    %v29 = vadd.f32 %v26, 1.0
    %v30 = vadd.f32 %v28, 1.0
    %v31 = vrcp.pop %v29
    %v32 = vmul.f32 1.0, %v31
    %v33 = vrcp.pop %v30
    %v34 = vmul.f32 1.0, %v33
    %v35 = vmul.f32 %v21, %v32
    %v36 = vmul.f32 %v22, %v34
    %37 = vst [vmem:[#allocation5] sm:$0xff] %v35
    %38 = vst [vmem:[#allocation5 + $0x8] sm:$0xff] %v36
    // Predicated region
    $region10: #{tpu_custom_call.1} parent=1 // pred_check
      _
    $region11: #{tpu_custom_call.1} parent=1 // pred_check_branch
      %40 = sbr.rel (0) target = $region13
    $region12: #{tpu_custom_call.1} parent=1 // pred_region
      %s42 = ssub.s32 256, 256
      %43 = vsyncadd [#allocation4], %s42
      %s45 = sshll.u32 [#allocation5], 4
      %s46 = int_to_ptr.vmem [resolvable:$true] %s45
      %48 = dma.vmem_to_hbm [thread:$0]  %s46, 256, %s1, [#allocation4]
    $region13: #{tpu_custom_call.1} parent=1 // pred_fallthru
      _
    // Predicated region
    $region14: #{tpu_custom_call.1} parent=1 // pred_check
      _
    $region15: #{tpu_custom_call.1} parent=1 // pred_check_branch
      %50 = sbr.rel (0) target = $region17
    $region16: #{tpu_custom_call.1} parent=1 // pred_region
      %51 = dma.done [#allocation4], 256
    $region17: #{tpu_custom_call.1} parent=1 // pred_fallthru
      _
    %52 = vsyncpa [#allocation3], 1
    %53 = vsyncpa [#allocation4], 1

</llo_original>
